<compile_context>
chip_gen: v7x
topology: tpu7x:2x2x1
jax: 0.10.0
libtpu: 0.0.40
codegen_flags: <defaults>
</compile_context>

<pallas_src>
import functools

import jax
import jax.numpy as jnp
from jax.experimental import pallas as pl
from jax.experimental.pallas import tpu as pltpu


def bc_mlp_kernel(x_ref, w1_ref, b1_ref, w2_ref, b2_ref, wmu_ref, bmu_ref,
                  out_ref):
    """Fused 3-layer MLP: (x@W1+b1)->ReLU->(@W2+b2)->Tanh->(@Wmu+bmu)."""
    x = x_ref[...]

    # Layer 1: Linear + ReLU
    h = jnp.dot(x, w1_ref[...], preferred_element_type=jnp.float32)
    h = h + b1_ref[...]                     # (bb, h1) + (1, h1) broadcast
    h = jnp.maximum(h, 0.0)

    # Layer 2 (last layer of `mlp`): Linear + Tanh (output_activation)
    h = jnp.dot(h, w2_ref[...], preferred_element_type=jnp.float32)
    h = h + b2_ref[...]
    h = jnp.tanh(h)

    # mu_layer: Linear, no activation; store the real act_dim columns.
    mu = jnp.dot(h, wmu_ref[...], preferred_element_type=jnp.float32)
    mu = mu + bmu_ref[...]

    out_ref[...] = mu.astype(out_ref.dtype)


def _round_up(x, m):
    return ((x + m - 1) // m) * m


@functools.partial(jax.jit, static_argnames=("block_b",))
def bc_mlp_forward(state, w1, b1, w2, b2, wmu, bmu, *, block_b=4096):
    B, state_dim = state.shape
    h1 = w1.shape[1]
    h2 = w2.shape[1]
    act_dim = wmu.shape[1]

    # ---- Batch tile selection (no input copy / padding). -------------------
    # Aim for an even number of grid steps (engages both TCs on v7x), keep the
    # tile a multiple of 8 sublanes, and never exceed block_b rows per step.
    n_steps = max(1, pl.cdiv(B, block_b))
    if n_steps > 1 and n_steps % 2 == 1:
        n_steps += 1
    elif n_steps == 1 and B >= 16:
        n_steps = 2
    bb = max(8, _round_up(pl.cdiv(B, n_steps), 8))
    grid = (pl.cdiv(B, bb),)   # ragged last block handled by Pallas masking

    # Advisory cost estimate: memory-bound on the (unpadded) state/out streams.
    flops = 2 * B * (state_dim * h1 + h1 * h2 + h2 * act_dim)
    bytes_accessed = 4 * (B * state_dim + B * act_dim
                          + state_dim * h1 + h1
                          + h1 * h2 + h2
                          + h2 * act_dim + act_dim)
    cost = pl.CostEstimate(flops=flops,
                           transcendentals=B * h2,
                           bytes_accessed=bytes_accessed)

    in_specs = [
        pl.BlockSpec((bb, state_dim), lambda i: (i, 0)),    # x tile
        pl.BlockSpec((state_dim, h1), lambda i: (0, 0)),    # W1 (grid-invariant)
        pl.BlockSpec((1, h1), lambda i: (0, 0)),            # b1
        pl.BlockSpec((h1, h2), lambda i: (0, 0)),           # W2
        pl.BlockSpec((1, h2), lambda i: (0, 0)),            # b2
        pl.BlockSpec((h2, act_dim), lambda i: (0, 0)),      # Wmu
        pl.BlockSpec((1, act_dim), lambda i: (0, 0)),       # bmu
    ]
    # Unpadded output block: last dim equals the full array dim, so it is a
    # legal (8,128)-rule block; stores are masked vst but count is unchanged.
    out_spec = pl.BlockSpec((bb, act_dim), lambda i: (i, 0))

    return pl.pallas_call(
        bc_mlp_kernel,
        out_shape=jax.ShapeDtypeStruct((B, act_dim), jnp.float32),
        grid=grid,
        in_specs=in_specs,
        out_specs=out_spec,
        compiler_params=pltpu.CompilerParams(
            dimension_semantics=("parallel",),
            # 48 MiB: legal on every generation (<= v7x's 64 MiB physical) and
            # makes block_b up to ~8192 compile without relying on per-chip
            # scoped-VMEM defaults (v5e default is only 16 MiB).
            vmem_limit_bytes=48 * 1024 * 1024,
        ),
        cost_estimate=cost,
    )(state, w1, b1, w2, b2, wmu, bmu)


def init_linear(key, fan_in, fan_out):
    """PyTorch-style init: U(-1/sqrt(fan_in), +1/sqrt(fan_in)).
    Weight stored as (in, out); bias as (1, out)."""
    kw, kb = jax.random.split(key)
    bound = 1.0 / jnp.sqrt(float(fan_in))
    w = jax.random.uniform(kw, (fan_in, fan_out), jnp.float32, -bound, bound)
    b = jax.random.uniform(kb, (1, fan_out), jnp.float32, -bound, bound)
    return w, b


def reference_forward(state, w1, b1, w2, b2, wmu, bmu):
    h = jnp.maximum(state @ w1 + b1, 0.0)
    h = jnp.tanh(h @ w2 + b2)
    return h @ wmu + bmu


if __name__ == "__main__":
    # Small shapes consistent with BC_mlp(state_dim, act_dim, hidden_dim)
    state_dim = 16
    hidden_dim = [32, 32]
    act_dim = 4

    key = jax.random.PRNGKey(0)
    k_x, k_x2, k1, k2, k3 = jax.random.split(key, 5)

    w1, b1 = init_linear(k1, state_dim, hidden_dim[0])
    w2, b2 = init_linear(k2, hidden_dim[0], hidden_dim[1])
    wmu, bmu = init_linear(k3, hidden_dim[1], act_dim)

    # Case 1: small aligned batch (exercises the 2-step parallel grid split).
    B = 16
    state = jax.random.normal(k_x, (B, state_dim), jnp.float32)
    mean = bc_mlp_forward(state, w1, b1, w2, b2, wmu, bmu)
    mean = jax.block_until_ready(mean)
    ref = reference_forward(state, w1, b1, w2, b2, wmu, bmu)
    assert mean.shape == (B, act_dim)
    assert jnp.allclose(mean, ref, atol=1e-5, rtol=1e-5), "mismatch (B=16)"

    # Case 2: non-divisible batch (exercises the ragged last-block path,
    # no wrapper-side padding copy).
    B2 = 50
    state2 = jax.random.normal(k_x2, (B2, state_dim), jnp.float32)
    mean2 = bc_mlp_forward(state2, w1, b1, w2, b2, wmu, bmu)
    mean2 = jax.block_until_ready(mean2)
    ref2 = reference_forward(state2, w1, b1, w2, b2, wmu, bmu)
    assert mean2.shape == (B2, act_dim)
    assert jnp.allclose(mean2, ref2, atol=1e-5, rtol=1e-5), "mismatch (B=50)"

    print("KERNEL_OK")
</pallas_src>

<mosaic_0001>
module attributes {stable_mosaic.version = 11 : i64} {
  func.func @bc_mlp_kernel(%arg0: i32, %arg1: memref<8x16xf32, #tpu.memory_space<vmem>>, %arg2: memref<16x32xf32, #tpu.memory_space<vmem>>, %arg3: memref<1x32xf32, #tpu.memory_space<vmem>>, %arg4: memref<32x32xf32, #tpu.memory_space<vmem>>, %arg5: memref<1x32xf32, #tpu.memory_space<vmem>>, %arg6: memref<32x4xf32, #tpu.memory_space<vmem>>, %arg7: memref<1x4xf32, #tpu.memory_space<vmem>>, %arg8: memref<8x4xf32, #tpu.memory_space<vmem>>) attributes {dimension_semantics = [#tpu.dimension_semantics<parallel>], iteration_bounds = array<i64: 2>, scalar_prefetch = 0 : i64, scratch_operands = 0 : i64, tpu.core_type = #tpu.core_type<tc>, window_params = [{transform_indices = @transform_0, window_bounds = array<i64: 8, 16>}, {pipeline_mode = #tpu.pipeline_mode<synchronous>, transform_indices = @transform_1, window_bounds = array<i64: 16, 32>}, {pipeline_mode = #tpu.pipeline_mode<synchronous>, transform_indices = @transform_2, window_bounds = array<i64: 1, 32>}, {pipeline_mode = #tpu.pipeline_mode<synchronous>, transform_indices = @transform_3, window_bounds = array<i64: 32, 32>}, {pipeline_mode = #tpu.pipeline_mode<synchronous>, transform_indices = @transform_4, window_bounds = array<i64: 1, 32>}, {pipeline_mode = #tpu.pipeline_mode<synchronous>, transform_indices = @transform_5, window_bounds = array<i64: 32, 4>}, {pipeline_mode = #tpu.pipeline_mode<synchronous>, transform_indices = @transform_6, window_bounds = array<i64: 1, 4>}, {transform_indices = @transform_7, window_bounds = array<i64: 8, 4>}]} {
    %c0 = arith.constant 0 : index
    %c0_0 = arith.constant 0 : index
    %0 = vector.load %arg1[%c0, %c0_0] : memref<8x16xf32, #tpu.memory_space<vmem>>, vector<8x16xf32>
    %c0_1 = arith.constant 0 : index
    %c0_2 = arith.constant 0 : index
    %1 = vector.load %arg2[%c0_1, %c0_2] : memref<16x32xf32, #tpu.memory_space<vmem>>, vector<16x32xf32>
    %cst = arith.constant dense<0.000000e+00> : vector<8x32xf32>
    %2 = tpu.matmul %0, %1, %cst {dimension_numbers = #tpu.dot_dimension_numbers<[1], [0], [0], [1], [0, 0, 1, 1], [], []>} : vector<8x16xf32>, vector<16x32xf32>, vector<8x32xf32> -> vector<8x32xf32>
    %c0_3 = arith.constant 0 : index
    %c0_4 = arith.constant 0 : index
    %3 = vector.load %arg3[%c0_3, %c0_4] : memref<1x32xf32, #tpu.memory_space<vmem>>, vector<1x32xf32>
    %4 = vector.broadcast %3 : vector<1x32xf32> to vector<8x32xf32>
    %5 = arith.addf %2, %4 : vector<8x32xf32>
    %cst_5 = arith.constant 0.000000e+00 : f32
    %6 = vector.broadcast %cst_5 : f32 to vector<8x32xf32>
    %7 = arith.maximumf %5, %6 : vector<8x32xf32>
    %c0_6 = arith.constant 0 : index
    %c0_7 = arith.constant 0 : index
    %8 = vector.load %arg4[%c0_6, %c0_7] : memref<32x32xf32, #tpu.memory_space<vmem>>, vector<32x32xf32>
    %cst_8 = arith.constant dense<0.000000e+00> : vector<8x32xf32>
    %9 = tpu.matmul %7, %8, %cst_8 {dimension_numbers = #tpu.dot_dimension_numbers<[1], [0], [0], [1], [0, 0, 1, 1], [], []>} : vector<8x32xf32>, vector<32x32xf32>, vector<8x32xf32> -> vector<8x32xf32>
    %c0_9 = arith.constant 0 : index
    %c0_10 = arith.constant 0 : index
    %10 = vector.load %arg5[%c0_9, %c0_10] : memref<1x32xf32, #tpu.memory_space<vmem>>, vector<1x32xf32>
    %11 = vector.broadcast %10 : vector<1x32xf32> to vector<8x32xf32>
    %12 = arith.addf %9, %11 : vector<8x32xf32>
    %13 = math.tanh %12 : vector<8x32xf32>
    %c0_11 = arith.constant 0 : index
    %c0_12 = arith.constant 0 : index
    %14 = vector.load %arg6[%c0_11, %c0_12] : memref<32x4xf32, #tpu.memory_space<vmem>>, vector<32x4xf32>
    %cst_13 = arith.constant dense<0.000000e+00> : vector<8x4xf32>
    %15 = tpu.matmul %13, %14, %cst_13 {dimension_numbers = #tpu.dot_dimension_numbers<[1], [0], [0], [1], [0, 0, 1, 1], [], []>} : vector<8x32xf32>, vector<32x4xf32>, vector<8x4xf32> -> vector<8x4xf32>
    %c0_14 = arith.constant 0 : index
    %c0_15 = arith.constant 0 : index
    %16 = vector.load %arg7[%c0_14, %c0_15] : memref<1x4xf32, #tpu.memory_space<vmem>>, vector<1x4xf32>
    %17 = vector.broadcast %16 : vector<1x4xf32> to vector<8x4xf32>
    %18 = arith.addf %15, %17 : vector<8x4xf32>
    %c0_16 = arith.constant 0 : index
    %c0_17 = arith.constant 0 : index
    %19 = vector.load %arg8[%c0_16, %c0_17] : memref<8x4xf32, #tpu.memory_space<vmem>>, vector<8x4xf32>
    tpu.vector_store %arg8[%c0_16, %c0_17], %18 {strides = array<i32>} : memref<8x4xf32, #tpu.memory_space<vmem>>, vector<8x4xf32>,
    return
  }
  func.func @transform_0(%arg0: i32) -> (i32, i32) {
    %c0_i32 = arith.constant 0 : i32
    %c0_i32_0 = arith.constant 0 : i32
    return %arg0, %c0_i32 : i32, i32
  }
  func.func @transform_1(%arg0: i32) -> (i32, i32) {
    %c0_i32 = arith.constant 0 : i32
    %c0_i32_0 = arith.constant 0 : i32
    %c0_i32_1 = arith.constant 0 : i32
    return %c0_i32, %c0_i32_0 : i32, i32
  }
  func.func @transform_2(%arg0: i32) -> (i32, i32) {
    %c0_i32 = arith.constant 0 : i32
    %c0_i32_0 = arith.constant 0 : i32
    %c0_i32_1 = arith.constant 0 : i32
    return %c0_i32, %c0_i32_0 : i32, i32
  }
  func.func @transform_3(%arg0: i32) -> (i32, i32) {
    %c0_i32 = arith.constant 0 : i32
    %c0_i32_0 = arith.constant 0 : i32
    %c0_i32_1 = arith.constant 0 : i32
    return %c0_i32, %c0_i32_0 : i32, i32
  }
  func.func @transform_4(%arg0: i32) -> (i32, i32) {
    %c0_i32 = arith.constant 0 : i32
    %c0_i32_0 = arith.constant 0 : i32
    %c0_i32_1 = arith.constant 0 : i32
    return %c0_i32, %c0_i32_0 : i32, i32
  }
  func.func @transform_5(%arg0: i32) -> (i32, i32) {
    %c0_i32 = arith.constant 0 : i32
    %c0_i32_0 = arith.constant 0 : i32
    %c0_i32_1 = arith.constant 0 : i32
    return %c0_i32, %c0_i32_0 : i32, i32
  }
  func.func @transform_6(%arg0: i32) -> (i32, i32) {
    %c0_i32 = arith.constant 0 : i32
    %c0_i32_0 = arith.constant 0 : i32
    %c0_i32_1 = arith.constant 0 : i32
    return %c0_i32, %c0_i32_0 : i32, i32
  }
  func.func @transform_7(%arg0: i32) -> (i32, i32) {
    %c0_i32 = arith.constant 0 : i32
    %c0_i32_0 = arith.constant 0 : i32
    return %arg0, %c0_i32 : i32, i32
  }
}

</mosaic_0001>

<llo_original>
// kernel: bc_mlp_forward.1
$region0: #{bc_mlp_forward.1}
  #allocation0 [shape = 'u32[]', space=smem, size = 0x4, offset = 0x4, fixed_abs, tag = 'smem constant byte address 0x4 - core index']
  #allocation1 [shape = 'u32[144,128]{1,0:T(1,128)}', space=vmem, size = 0x12000, scoped, tag = 'internal scratch']
  %s0 = inlined_call_operand.hbm [shape: f32[16,16], index: 0, kind: input, shape index: {}]
  %s1 = inlined_call_operand.hbm [shape: f32[16,32], index: 1, kind: input, shape index: {}]
  %s2 = inlined_call_operand.vmem [shape: f32[1,32], index: 2, kind: input, shape index: {}]
  %s3 = inlined_call_operand.vmem [shape: f32[32,32], index: 3, kind: input, shape index: {}]
  %s4 = inlined_call_operand.vmem [shape: f32[1,32], index: 4, kind: input, shape index: {}]
  %s5 = inlined_call_operand.vmem [shape: f32[32,4], index: 5, kind: input, shape index: {}]
  %s6 = inlined_call_operand.vmem [shape: f32[1,4], index: 6, kind: input, shape index: {}]
  %s7 = inlined_call_operand.vmem [shape: f32[16,4], index: 7, kind: output, shape index: {}]
  %s8 = sld [smem:[#allocation0]]
  $region69: #{bc_mlp_forward.1} parent=0
    _
  %s10 = ssub.s32 1, %s8
  %s11 = scalar_select 0, %s10, %s8
  $region1: #{bc_mlp_forward.1} parent=0
    #allocation2 [shape = 'u8[8192]{0}', space=vmem, size = 0x2000, scoped, tag = 'input window, operand 0']
    #allocation3 [shape = 's32[2]{0}', space=sflag, size = 0x8, scoped, tag = 'scoped memory for bc_mlp_forward.1']
    #allocation4 [shape = 'u8[8192]{0}', space=vmem, size = 0x2000, scoped, tag = 'input window, operand 1, single buffered']
    #allocation5 [shape = 's32[1]{0}', space=sflag, size = 0x4, scoped, tag = 'scoped memory for bc_mlp_forward.1']
    %12 = vsyncpa [#allocation3], 0
    %s13 = scalar_lea.sflag [#allocation3], 1
    %14 = vsyncpa %s13, 0
    %15 = vsyncpa [#allocation5], 0
    loop: start=0, step=1, limit=4
    $region2: #{bc_mlp_forward.1} parent=1 // loop_pre_header
      _
    $region3: #{bc_mlp_forward.1} parent=1 // loop_header
      %s17 = sphi 0, %s21
      %p18 = scmp.ge.s32.totalorder %s17, 4
      %s27 = sphi 0, %s29
      %s30 = sphi 0, %s27
      %s31 = sphi 0, %s30
      %s47 = sphi 0, %s31
      %s51 = sphi 0, %s51
      %s53 = sphi 0, %s51
      %s54 = sphi 0, %s53
      %s68 = sphi 0, %s54
      %s72 = sphi 0, %s72
      %s74 = sphi 0, %s72
      %s75 = sphi 0, %s74
      %s89 = sphi 0, %s75
      %s93 = sphi 0, %s93
      %s95 = sphi 0, %s93
      %s96 = sphi 0, %s95
      %s110 = sphi 0, %s96
      %s114 = sphi 0, %s114
      %s116 = sphi 0, %s114
      %s117 = sphi 0, %s116
      %s131 = sphi 0, %s117
      %s135 = sphi 0, %s135
      %s137 = sphi 0, %s135
      %s138 = sphi 0, %s137
      %s152 = sphi 0, %s138
      %s156 = sphi 0, %s156
      %s158 = sphi 0, %s156
      %s159 = sphi 0, %s158
      %s173 = sphi 0, %s159
      %s179 = sphi 0, %s181
      %s182 = sphi 0, %s179
      %s183 = sphi 0, %s182
      %s199 = sphi 0, %s183
    $region4: #{bc_mlp_forward.1} parent=1 // loop_header_branch
      %20 = sbr.rel (%p18) target = $region8
    $region5: #{bc_mlp_forward.1} parent=1 // loop_body
      %s22 = ssub.s32 %s17, 1
      %s23 = ssub.s32 %s17, 2
      %s24 = sadd.s32 %s17, 1
      %s25 = ssub.s32 %s17, %s24
      %p26 = scmp.eq.s32.totalorder %s25, 0
      %s28 = sadd.s32 %s27, 1
      %s29 = scalar_select %p26, %s27, %s28
      %p32 = pneg %p26
      %p33 = scmp.eq.s32.totalorder %s17, 1
      %p34 = por %p32, %p33
      %p35 = scmp.ne.s32.totalorder %s27, %s30
      %p36 = scmp.eq.s32.totalorder %s17, 0
      %p37 = por %p35, %p36
      %p38 = scmp.ne.s32.totalorder %s27, %s30
      %p39 = scmp.eq.s32.totalorder %s22, 1
      %p40 = por %p38, %p39
      %p41 = scmp.ne.s32.totalorder %s30, %s31
      %p42 = scmp.eq.s32.totalorder %s22, 0
      %p43 = por %p41, %p42
      %p44 = scmp.ne.s32.totalorder %s30, %s31
      %p45 = scmp.eq.s32.totalorder %s23, 1
      %p46 = por %p44, %p45
      %p48 = scmp.ne.s32.totalorder %s31, %s47
      %p49 = scmp.eq.s32.totalorder %s23, 0
      %p50 = por %p48, %p49
      %s52 = sadd.s32 %s51, 1
      %p55 = scmp.eq.s32.totalorder %s17, 1
      %p56 = scmp.ne.s32.totalorder %s51, %s53
      %p57 = scmp.eq.s32.totalorder %s17, 0
      %p58 = por %p56, %p57
      %p59 = scmp.ne.s32.totalorder %s51, %s53
      %p60 = scmp.eq.s32.totalorder %s22, 1
      %p61 = por %p59, %p60
      %p62 = scmp.ne.s32.totalorder %s53, %s54
      %p63 = scmp.eq.s32.totalorder %s22, 0
      %p64 = por %p62, %p63
      %p65 = scmp.ne.s32.totalorder %s53, %s54
      %p66 = scmp.eq.s32.totalorder %s23, 1
      %p67 = por %p65, %p66
      %p69 = scmp.ne.s32.totalorder %s54, %s68
      %p70 = scmp.eq.s32.totalorder %s23, 0
      %p71 = por %p69, %p70
      %s73 = sadd.s32 %s72, 1
      %p76 = scmp.eq.s32.totalorder %s17, 1
      %p77 = scmp.ne.s32.totalorder %s72, %s74
      %p78 = scmp.eq.s32.totalorder %s17, 0
      %p79 = por %p77, %p78
      %p80 = scmp.ne.s32.totalorder %s72, %s74
      %p81 = scmp.eq.s32.totalorder %s22, 1
      %p82 = por %p80, %p81
      %p83 = scmp.ne.s32.totalorder %s74, %s75
      %p84 = scmp.eq.s32.totalorder %s22, 0
      %p85 = por %p83, %p84
      %p86 = scmp.ne.s32.totalorder %s74, %s75
      %p87 = scmp.eq.s32.totalorder %s23, 1
      %p88 = por %p86, %p87
      %p90 = scmp.ne.s32.totalorder %s75, %s89
      %p91 = scmp.eq.s32.totalorder %s23, 0
      %p92 = por %p90, %p91
      %s94 = sadd.s32 %s93, 1
      %p97 = scmp.eq.s32.totalorder %s17, 1
      %p98 = scmp.ne.s32.totalorder %s93, %s95
      %p99 = scmp.eq.s32.totalorder %s17, 0
      %p100 = por %p98, %p99
      %p101 = scmp.ne.s32.totalorder %s93, %s95
      %p102 = scmp.eq.s32.totalorder %s22, 1
      %p103 = por %p101, %p102
      %p104 = scmp.ne.s32.totalorder %s95, %s96
      %p105 = scmp.eq.s32.totalorder %s22, 0
      %p106 = por %p104, %p105
      %p107 = scmp.ne.s32.totalorder %s95, %s96
      %p108 = scmp.eq.s32.totalorder %s23, 1
      %p109 = por %p107, %p108
      %p111 = scmp.ne.s32.totalorder %s96, %s110
      %p112 = scmp.eq.s32.totalorder %s23, 0
      %p113 = por %p111, %p112
      %s115 = sadd.s32 %s114, 1
      %p118 = scmp.eq.s32.totalorder %s17, 1
      %p119 = scmp.ne.s32.totalorder %s114, %s116
      %p120 = scmp.eq.s32.totalorder %s17, 0
      %p121 = por %p119, %p120
      %p122 = scmp.ne.s32.totalorder %s114, %s116
      %p123 = scmp.eq.s32.totalorder %s22, 1
      %p124 = por %p122, %p123
      %p125 = scmp.ne.s32.totalorder %s116, %s117
      %p126 = scmp.eq.s32.totalorder %s22, 0
      %p127 = por %p125, %p126
      %p128 = scmp.ne.s32.totalorder %s116, %s117
      %p129 = scmp.eq.s32.totalorder %s23, 1
      %p130 = por %p128, %p129
      %p132 = scmp.ne.s32.totalorder %s117, %s131
      %p133 = scmp.eq.s32.totalorder %s23, 0
      %p134 = por %p132, %p133
      %s136 = sadd.s32 %s135, 1
      %p139 = scmp.eq.s32.totalorder %s17, 1
      %p140 = scmp.ne.s32.totalorder %s135, %s137
      %p141 = scmp.eq.s32.totalorder %s17, 0
      %p142 = por %p140, %p141
      %p143 = scmp.ne.s32.totalorder %s135, %s137
      %p144 = scmp.eq.s32.totalorder %s22, 1
      %p145 = por %p143, %p144
      %p146 = scmp.ne.s32.totalorder %s137, %s138
      %p147 = scmp.eq.s32.totalorder %s22, 0
      %p148 = por %p146, %p147
      %p149 = scmp.ne.s32.totalorder %s137, %s138
      %p150 = scmp.eq.s32.totalorder %s23, 1
      %p151 = por %p149, %p150
      %p153 = scmp.ne.s32.totalorder %s138, %s152
      %p154 = scmp.eq.s32.totalorder %s23, 0
      %p155 = por %p153, %p154
      %s157 = sadd.s32 %s156, 1
      %p160 = scmp.eq.s32.totalorder %s17, 1
      %p161 = scmp.ne.s32.totalorder %s156, %s158
      %p162 = scmp.eq.s32.totalorder %s17, 0
      %p163 = por %p161, %p162
      %p164 = scmp.ne.s32.totalorder %s156, %s158
      %p165 = scmp.eq.s32.totalorder %s22, 1
      %p166 = por %p164, %p165
      %p167 = scmp.ne.s32.totalorder %s158, %s159
      %p168 = scmp.eq.s32.totalorder %s22, 0
      %p169 = por %p167, %p168
      %p170 = scmp.ne.s32.totalorder %s158, %s159
      %p171 = scmp.eq.s32.totalorder %s23, 1
      %p172 = por %p170, %p171
      %p174 = scmp.ne.s32.totalorder %s159, %s173
      %p175 = scmp.eq.s32.totalorder %s23, 0
      %p176 = por %p174, %p175
      %s177 = ssub.s32 %s17, %s24
      %p178 = scmp.eq.s32.totalorder %s177, 0
      %s180 = sadd.s32 %s179, 1
      %s181 = scalar_select %p178, %s179, %s180
      %p184 = pneg %p178
      %p185 = scmp.eq.s32.totalorder %s17, 1
      %p186 = por %p184, %p185
      %p187 = scmp.ne.s32.totalorder %s179, %s182
      %p188 = scmp.eq.s32.totalorder %s17, 0
      %p189 = por %p187, %p188
      %p190 = scmp.ne.s32.totalorder %s179, %s182
      %p191 = scmp.eq.s32.totalorder %s22, 1
      %p192 = por %p190, %p191
      %p193 = scmp.ne.s32.totalorder %s182, %s183
      %p194 = scmp.eq.s32.totalorder %s22, 0
      %p195 = por %p193, %p194
      %p196 = scmp.ne.s32.totalorder %s182, %s183
      %p197 = scmp.eq.s32.totalorder %s23, 1
      %p198 = por %p196, %p197
      %p200 = scmp.ne.s32.totalorder %s183, %s199
      %p201 = scmp.eq.s32.totalorder %s23, 0
      %p202 = por %p200, %p201
      %p203 = scmp.le.s32.totalorder 1, %s17
      %p204 = scmp.lt.s32.totalorder %s17, 3
      %p205 = pnand %p203, %p204
      %p206 = pneg %p205
      // Predicated region
      $region9: #{bc_mlp_forward.1} parent=5 // pred_check
        _
      $region10: #{bc_mlp_forward.1} parent=5 // pred_check_branch
        %208 = sbr.rel (%p205) target = $region12
      $region11: #{bc_mlp_forward.1} parent=5 // pred_region
        %s209 = ssub.s32 %s17, 1
        // Predicated region
        $region13: #{bc_mlp_forward.1} parent=11 // pred_check
          %p210 = pneg %p64
        $region14: #{bc_mlp_forward.1} parent=11 // pred_check_branch
          %212 = sbr.rel (%p210) target = $region16
        $region15: #{bc_mlp_forward.1} parent=11 // pred_region
          %s214 = ssub.s32 256, 256
          %215 = vsyncadd [#allocation5], %s214
          %s216 = sshll.u32 [#allocation4], 4
          %s217 = int_to_ptr.vmem [resolvable:$true] %s216
          %222 = dma.hbm_to_vmem [thread:$0]  %s1, 256, %s217, [#allocation5], 128, 128, 8
        $region16: #{bc_mlp_forward.1} parent=11 // pred_fallthru
          _
        // Predicated region
        $region17: #{bc_mlp_forward.1} parent=11 // pred_check
          %p223 = pneg %p85
        $region18: #{bc_mlp_forward.1} parent=11 // pred_check_branch
          %225 = sbr.rel (%p223) target = $region20
        $region19: #{bc_mlp_forward.1} parent=11 // pred_region
          _
        $region20: #{bc_mlp_forward.1} parent=11 // pred_fallthru
          _
        // Predicated region
        $region21: #{bc_mlp_forward.1} parent=11 // pred_check
          %p226 = pneg %p106
        $region22: #{bc_mlp_forward.1} parent=11 // pred_check_branch
          %228 = sbr.rel (%p226) target = $region24
        $region23: #{bc_mlp_forward.1} parent=11 // pred_region
          _
        $region24: #{bc_mlp_forward.1} parent=11 // pred_fallthru
          _
        // Predicated region
        $region25: #{bc_mlp_forward.1} parent=11 // pred_check
          %p229 = pneg %p127
        $region26: #{bc_mlp_forward.1} parent=11 // pred_check_branch
          %231 = sbr.rel (%p229) target = $region28
        $region27: #{bc_mlp_forward.1} parent=11 // pred_region
          _
        $region28: #{bc_mlp_forward.1} parent=11 // pred_fallthru
          _
        // Predicated region
        $region29: #{bc_mlp_forward.1} parent=11 // pred_check
          %p232 = pneg %p148
        $region30: #{bc_mlp_forward.1} parent=11 // pred_check_branch
          %234 = sbr.rel (%p232) target = $region32
        $region31: #{bc_mlp_forward.1} parent=11 // pred_region
          _
        $region32: #{bc_mlp_forward.1} parent=11 // pred_fallthru
          _
        // Predicated region
        $region33: #{bc_mlp_forward.1} parent=11 // pred_check
          %p235 = pneg %p169
        $region34: #{bc_mlp_forward.1} parent=11 // pred_check_branch
          %237 = sbr.rel (%p235) target = $region36
        $region35: #{bc_mlp_forward.1} parent=11 // pred_region
          _
        $region36: #{bc_mlp_forward.1} parent=11 // pred_fallthru
          _
      $region12: #{bc_mlp_forward.1} parent=5 // pred_fallthru
        _
      %p238 = scmp.lt.s32.totalorder %s17, 2
      // Predicated region
      $region37: #{bc_mlp_forward.1} parent=5 // pred_check
        %p239 = pneg %p238
      $region38: #{bc_mlp_forward.1} parent=5 // pred_check_branch
        %241 = sbr.rel (%p239) target = $region40
      $region39: #{bc_mlp_forward.1} parent=5 // pred_region
        // Predicated region
        $region41: #{bc_mlp_forward.1} parent=39 // pred_check
          %p242 = pneg %p37
        $region42: #{bc_mlp_forward.1} parent=39 // pred_check_branch
          %244 = sbr.rel (%p242) target = $region44
        $region43: #{bc_mlp_forward.1} parent=39 // pred_region
          %s245 = sand.u32 %s27, 1
          %s246 = scalar_lea.sflag [#allocation3], %s245
          %s247 = sand.u32 %s27, 1
          %s248 = smul.addr %s247, 8
          %s249 = scalar_lea.vmem [#allocation2], %s248
          %s251 = ssub.s32 128, 128
          %252 = vsyncadd %s246, %s251
          %s253 = smul.addr %s17, 128
          %s254 = scalar_lea.hbm %s0, %s253
          %s256 = sshll.u32 %s249, 4
          %s257 = int_to_ptr.vmem [resolvable:$true] %s256
          %259 = dma.hbm_to_vmem [thread:$0]  %s254, 128, %s257, %s246
        $region44: #{bc_mlp_forward.1} parent=39 // pred_fallthru
          _
      $region40: #{bc_mlp_forward.1} parent=5 // pred_fallthru
        _
      %p260 = scmp.le.s32.totalorder 1, %s17
      %p261 = scmp.lt.s32.totalorder %s17, 3
      %p262 = pnand %p260, %p261
      %p263 = pneg %p262
      // Predicated region
      $region45: #{bc_mlp_forward.1} parent=5 // pred_check
        _
      $region46: #{bc_mlp_forward.1} parent=5 // pred_check_branch
        %265 = sbr.rel (%p262) target = $region48
      $region47: #{bc_mlp_forward.1} parent=5 // pred_region
        %s266 = ssub.s32 %s17, 1
        %s267 = sand.u32 %s30, 1
        %s268 = scalar_lea.sflag [#allocation3], %s267
        %s269 = sand.u32 %s30, 1
        %s270 = smul.addr %s269, 8
        %s271 = scalar_lea.vmem [#allocation2], %s270
        // Predicated region
        $region49: #{bc_mlp_forward.1} parent=47 // pred_check
          %p272 = pneg %p43
        $region50: #{bc_mlp_forward.1} parent=47 // pred_check_branch
          %274 = sbr.rel (%p272) target = $region52
        $region51: #{bc_mlp_forward.1} parent=47 // pred_region
          %275 = dma.done %s268, 128
        $region52: #{bc_mlp_forward.1} parent=47 // pred_fallthru
          _
        // Predicated region
        $region53: #{bc_mlp_forward.1} parent=47 // pred_check
          %p276 = pneg %p64
        $region54: #{bc_mlp_forward.1} parent=47 // pred_check_branch
          %278 = sbr.rel (%p276) target = $region56
        $region55: #{bc_mlp_forward.1} parent=47 // pred_region
          %279 = dma.done [#allocation5], 256
        $region56: #{bc_mlp_forward.1} parent=47 // pred_fallthru
          _
        %s280 = sand.u32 %s30, 1
        %s281 = scalar_lea.sflag [#allocation3], %s280
        %s282 = sand.u32 %s30, 1
        %s283 = smul.addr %s282, 8
        %s284 = scalar_lea.vmem [#allocation2], %s283
        %p285 = pneg %p43
        %p286 = pneg %p40
        %p287 = pneg %p64
        %p288 = pneg %p61
        %p289 = pneg %p85
        %p290 = pneg %p82
        %p291 = pneg %p106
        %p292 = pneg %p103
        %p293 = pneg %p127
        %p294 = pneg %p124
        %p295 = pneg %p148
        %p296 = pneg %p145
        %p297 = pneg %p169
        %p298 = pneg %p166
        %p299 = pneg %p195
        %p300 = pneg %p192
        %p301 = scmp.lt.s32.totalorder %s22, 1
        %s302 = scalar_select %p301, %s22, 1
        %s303 = smul.addr %s302, 8
        %s304 = scalar_lea.vmem %s7, %s303
        %p305 = scmp.lt.s32.totalorder %s22, 1
        %s306 = scalar_select %p305, %s22, 1
        %s307 = smul.addr %s306, 8
        %s308 = scalar_lea.vmem %s7, %s307
        %v309 = vld [vmem:[%s271] sm:$0xff]
        %v310 = vld [vmem:[#allocation4] sm:$0xff]
        %v311 = vld [vmem:[#allocation4 + $0x8] sm:$0xff]
        %v312 = vld [vmem:[%s2] sm:$0x1]
        %v314 = vlaneseq
        %v315 = vshrl.u32 %v314, 7
        %v316 = vsub.s32 0, %v315
        %v317 = vrot.slane %v312, %v316
        %vm319 = vcmask 130048
        %v321 = vsel %vm319, %v309, 0
        %323 = vmatprep.subr.mxu0 0.0
        %324 = vmatpush1.msra.mxu0 %v310
        %325 = vmatprep.subr.mxu0 0.0
        %326 = vmatpush1.msra.mxu0 %v311
        %327 = vmatprep.subr.mxu0 0.0
        %328 = vmatpush1.msra.mxu0 0.0
        %329 = vmatprep.subr.mxu0 0.0
        %330 = vmatpush1.msra.mxu0 0.0
        %331 = vmatprep.subr.mxu0 0.0
        %332 = vmatpush1.msra.mxu0 0.0
        %333 = vmatprep.subr.mxu0 0.0
        %334 = vmatpush1.msra.mxu0 0.0
        %335 = vmatprep.subr.mxu0 0.0
        %336 = vmatpush1.msra.mxu0 0.0
        %337 = vmatprep.subr.mxu0 0.0
        %338 = vmatpush1.msra.mxu0 0.0
        %339 = vmatprep.subr.mxu0 0.0
        %340 = vmatpush1.msra.mxu0 0.0
        %341 = vmatprep.subr.mxu0 0.0
        %342 = vmatpush1.msra.mxu0 0.0
        %343 = vmatprep.subr.mxu0 0.0
        %344 = vmatpush1.msra.mxu0 0.0
        %345 = vmatprep.subr.mxu0 0.0
        %346 = vmatpush1.msra.mxu0 0.0
        %347 = vmatprep.subr.mxu0 0.0
        %348 = vmatpush1.msra.mxu0 0.0
        %349 = vmatprep.subr.mxu0 0.0
        %350 = vmatpush1.msra.mxu0 0.0
        %351 = vmatprep.subr.mxu0 0.0
        %352 = vmatpush1.msra.mxu0 0.0
        %353 = vmatprep.subr.mxu0 0.0
        %354 = vmatpush1.msra.mxu0 0.0
        %355 = vmatprep.subr.mxu0 0.0
        %356 = vmatpush1.msra.mxu0 0.0
        %357 = vmatprep.subr.mxu0 0.0
        %358 = vmatpush1.msra.mxu0 0.0
        %359 = vmatprep.subr.mxu0 0.0
        %360 = vmatpush1.msra.mxu0 0.0
        %361 = vmatprep.subr.mxu0 0.0
        %362 = vmatpush1.msra.mxu0 0.0
        %363 = vmatprep.subr.mxu0 0.0
        %364 = vmatpush1.msra.mxu0 0.0
        %365 = vmatprep.subr.mxu0 0.0
        %366 = vmatpush1.msra.mxu0 0.0
        %367 = vmatprep.subr.mxu0 0.0
        %368 = vmatpush1.msra.mxu0 0.0
        %369 = vmatprep.subr.mxu0 0.0
        %370 = vmatpush1.msra.mxu0 0.0
        %371 = vmatprep.subr.mxu0 0.0
        %372 = vmatpush1.msra.mxu0 0.0
        %373 = vmatprep.subr.mxu0 0.0
        %374 = vmatpush1.msra.mxu0 0.0
        %375 = vmatprep.subr.mxu0 0.0
        %376 = vmatpush1.msra.mxu0 0.0
        %377 = vmatprep.subr.mxu0 0.0
        %378 = vmatpush1.msra.mxu0 0.0
        %379 = vmatprep.subr.mxu0 0.0
        %380 = vmatpush1.msra.mxu0 0.0
        %381 = vmatprep.subr.mxu0 0.0
        %382 = vmatpush1.msra.mxu0 0.0
        %383 = vmatprep.subr.mxu0 0.0
        %384 = vmatpush1.msra.mxu0 0.0
        %385 = vmatprep.subr.mxu0 0.0
        %386 = vmatpush1.msra.mxu0 0.0
        %387 = vmatprep.mubr.f32.mxu0 0.0
        %388 = vmatmul.mubr.f32.gmra.mrb[0].mxu0 %v321
        %v389 = vpop.f32.mrb[0].mxu0
        %v390 = vadd.f32 %v317, %v389
        %v391 = vpop.f32.mrb[0].mxu0
        %392 = vdwg.mxu0
        %v393 = vmax.f32 %v390, 0.0
        %v394 = vld [vmem:[%s3] sm:$0xff]
        %v395 = vld [vmem:[%s3 + $0x8] sm:$0xff]
        %v396 = vld [vmem:[%s3 + $0x10] sm:$0xff]
        %v397 = vld [vmem:[%s3 + $0x18] sm:$0xff]
        %v398 = vld [vmem:[%s4] sm:$0x1]
        %v400 = vlaneseq
        %v401 = vshrl.u32 %v400, 7
        %v402 = vsub.s32 0, %v401
        %v403 = vrot.slane %v398, %v402
        %vm405 = vcmask 261120
        %v407 = vsel %vm405, %v393, 0
        %409 = vmatprep.subr.mxu0 0.0
        %410 = vmatpush1.msra.mxu0 %v394
        %411 = vmatprep.subr.mxu0 0.0
        %412 = vmatpush1.msra.mxu0 %v395
        %413 = vmatprep.subr.mxu0 0.0
        %414 = vmatpush1.msra.mxu0 %v396
        %415 = vmatprep.subr.mxu0 0.0
        %416 = vmatpush1.msra.mxu0 %v397
        %417 = vmatprep.subr.mxu0 0.0
        %418 = vmatpush1.msra.mxu0 0.0
        %419 = vmatprep.subr.mxu0 0.0
        %420 = vmatpush1.msra.mxu0 0.0
        %421 = vmatprep.subr.mxu0 0.0
        %422 = vmatpush1.msra.mxu0 0.0
        %423 = vmatprep.subr.mxu0 0.0
        %424 = vmatpush1.msra.mxu0 0.0
        %425 = vmatprep.subr.mxu0 0.0
        %426 = vmatpush1.msra.mxu0 0.0
        %427 = vmatprep.subr.mxu0 0.0
        %428 = vmatpush1.msra.mxu0 0.0
        %429 = vmatprep.subr.mxu0 0.0
        %430 = vmatpush1.msra.mxu0 0.0
        %431 = vmatprep.subr.mxu0 0.0
        %432 = vmatpush1.msra.mxu0 0.0
        %433 = vmatprep.subr.mxu0 0.0
        %434 = vmatpush1.msra.mxu0 0.0
        %435 = vmatprep.subr.mxu0 0.0
        %436 = vmatpush1.msra.mxu0 0.0
        %437 = vmatprep.subr.mxu0 0.0
        %438 = vmatpush1.msra.mxu0 0.0
        %439 = vmatprep.subr.mxu0 0.0
        %440 = vmatpush1.msra.mxu0 0.0
        %441 = vmatprep.subr.mxu0 0.0
        %442 = vmatpush1.msra.mxu0 0.0
        %443 = vmatprep.subr.mxu0 0.0
        %444 = vmatpush1.msra.mxu0 0.0
        %445 = vmatprep.subr.mxu0 0.0
        %446 = vmatpush1.msra.mxu0 0.0
        %447 = vmatprep.subr.mxu0 0.0
        %448 = vmatpush1.msra.mxu0 0.0
        %449 = vmatprep.subr.mxu0 0.0
        %450 = vmatpush1.msra.mxu0 0.0
        %451 = vmatprep.subr.mxu0 0.0
        %452 = vmatpush1.msra.mxu0 0.0
        %453 = vmatprep.subr.mxu0 0.0
        %454 = vmatpush1.msra.mxu0 0.0
        %455 = vmatprep.subr.mxu0 0.0
        %456 = vmatpush1.msra.mxu0 0.0
        %457 = vmatprep.subr.mxu0 0.0
        %458 = vmatpush1.msra.mxu0 0.0
        %459 = vmatprep.subr.mxu0 0.0
        %460 = vmatpush1.msra.mxu0 0.0
        %461 = vmatprep.subr.mxu0 0.0
        %462 = vmatpush1.msra.mxu0 0.0
        %463 = vmatprep.subr.mxu0 0.0
        %464 = vmatpush1.msra.mxu0 0.0
        %465 = vmatprep.subr.mxu0 0.0
        %466 = vmatpush1.msra.mxu0 0.0
        %467 = vmatprep.subr.mxu0 0.0
        %468 = vmatpush1.msra.mxu0 0.0
        %469 = vmatprep.subr.mxu0 0.0
        %470 = vmatpush1.msra.mxu0 0.0
        %471 = vmatprep.subr.mxu0 0.0
        %472 = vmatpush1.msra.mxu0 0.0
        %473 = vmatprep.mubr.f32.mxu0 0.0
        %474 = vmatmul.mubr.f32.gmra.mrb[0].mxu0 %v407
        %v475 = vpop.f32.mrb[0].mxu0
        %v476 = vadd.f32 %v403, %v475
        %v477 = vpop.f32.mrb[0].mxu0
        %478 = vdwg.mxu0
        %v479 = vtanh.pop %v476
        %v480 = vld [vmem:[%s5] sm:$0xff]
        %v481 = vld [vmem:[%s5 + $0x8] sm:$0xff]
        %v482 = vld [vmem:[%s5 + $0x10] sm:$0xff]
        %v483 = vld [vmem:[%s5 + $0x18] sm:$0xff]
        %v484 = vld [vmem:[%s6] sm:$0x1]
        %v486 = vlaneseq
        %v487 = vshrl.u32 %v486, 7
        %v488 = vsub.s32 0, %v487
        %v489 = vrot.slane %v484, %v488
        %v492 = vsel %vm405, %v479, 0
        %494 = vmatprep.subr.mxu0 0.0
        %495 = vmatpush1.msra.mxu0 %v480
        %496 = vmatprep.subr.mxu0 0.0
        %497 = vmatpush1.msra.mxu0 %v481
        %498 = vmatprep.subr.mxu0 0.0
        %499 = vmatpush1.msra.mxu0 %v482
        %500 = vmatprep.subr.mxu0 0.0
        %501 = vmatpush1.msra.mxu0 %v483
        %502 = vmatprep.subr.mxu0 0.0
        %503 = vmatpush1.msra.mxu0 0.0
        %504 = vmatprep.subr.mxu0 0.0
        %505 = vmatpush1.msra.mxu0 0.0
        %506 = vmatprep.subr.mxu0 0.0
        %507 = vmatpush1.msra.mxu0 0.0
        %508 = vmatprep.subr.mxu0 0.0
        %509 = vmatpush1.msra.mxu0 0.0
        %510 = vmatprep.subr.mxu0 0.0
        %511 = vmatpush1.msra.mxu0 0.0
        %512 = vmatprep.subr.mxu0 0.0
        %513 = vmatpush1.msra.mxu0 0.0
        %514 = vmatprep.subr.mxu0 0.0
        %515 = vmatpush1.msra.mxu0 0.0
        %516 = vmatprep.subr.mxu0 0.0
        %517 = vmatpush1.msra.mxu0 0.0
        %518 = vmatprep.subr.mxu0 0.0
        %519 = vmatpush1.msra.mxu0 0.0
        %520 = vmatprep.subr.mxu0 0.0
        %521 = vmatpush1.msra.mxu0 0.0
        %522 = vmatprep.subr.mxu0 0.0
        %523 = vmatpush1.msra.mxu0 0.0
        %524 = vmatprep.subr.mxu0 0.0
        %525 = vmatpush1.msra.mxu0 0.0
        %526 = vmatprep.subr.mxu0 0.0
        %527 = vmatpush1.msra.mxu0 0.0
        %528 = vmatprep.subr.mxu0 0.0
        %529 = vmatpush1.msra.mxu0 0.0
        %530 = vmatprep.subr.mxu0 0.0
        %531 = vmatpush1.msra.mxu0 0.0
        %532 = vmatprep.subr.mxu0 0.0
        %533 = vmatpush1.msra.mxu0 0.0
        %534 = vmatprep.subr.mxu0 0.0
        %535 = vmatpush1.msra.mxu0 0.0
        %536 = vmatprep.subr.mxu0 0.0
        %537 = vmatpush1.msra.mxu0 0.0
        %538 = vmatprep.subr.mxu0 0.0
        %539 = vmatpush1.msra.mxu0 0.0
        %540 = vmatprep.subr.mxu0 0.0
        %541 = vmatpush1.msra.mxu0 0.0
        %542 = vmatprep.subr.mxu0 0.0
        %543 = vmatpush1.msra.mxu0 0.0
        %544 = vmatprep.subr.mxu0 0.0
        %545 = vmatpush1.msra.mxu0 0.0
        %546 = vmatprep.subr.mxu0 0.0
        %547 = vmatpush1.msra.mxu0 0.0
        %548 = vmatprep.subr.mxu0 0.0
        %549 = vmatpush1.msra.mxu0 0.0
        %550 = vmatprep.subr.mxu0 0.0
        %551 = vmatpush1.msra.mxu0 0.0
        %552 = vmatprep.subr.mxu0 0.0
        %553 = vmatpush1.msra.mxu0 0.0
        %554 = vmatprep.subr.mxu0 0.0
        %555 = vmatpush1.msra.mxu0 0.0
        %556 = vmatprep.subr.mxu0 0.0
        %557 = vmatpush1.msra.mxu0 0.0
        %558 = vmatprep.mubr.f32.mxu0 0.0
        %559 = vmatmul.mubr.f32.gmra.mrb[0].mxu0 %v492
        %v560 = vpop.f32.mrb[0].mxu0
        %v561 = vadd.f32 %v489, %v560
        %v562 = vpop.f32.mrb[0].mxu0
        %563 = vdwg.mxu0
        %vm564 = vcmask 31744
        %565 = vst.msk [vmem:[%s308] sm:$0xff] %vm564, %v561
        %p566 = scmp.lt.s32.totalorder %s22, 1
        %s567 = scalar_select %p566, %s22, 1
        %s568 = smul.addr %s567, 8
        %s569 = scalar_lea.vmem %s7, %s568
        // Predicated region
        $region57: #{bc_mlp_forward.1} parent=47 // pred_check
          %p570 = pneg %p192
        $region58: #{bc_mlp_forward.1} parent=47 // pred_check_branch
          %572 = sbr.rel (%p570) target = $region60
        $region59: #{bc_mlp_forward.1} parent=47 // pred_region
          _
        $region60: #{bc_mlp_forward.1} parent=47 // pred_fallthru
          _
      $region48: #{bc_mlp_forward.1} parent=5 // pred_fallthru
        _
      %p573 = scmp.le.s32.totalorder 2, %s17
      // Predicated region
      $region61: #{bc_mlp_forward.1} parent=5 // pred_check
        %p574 = pneg %p573
      $region62: #{bc_mlp_forward.1} parent=5 // pred_check_branch
        %576 = sbr.rel (%p574) target = $region64
      $region63: #{bc_mlp_forward.1} parent=5 // pred_region
        %s577 = ssub.s32 %s17, 2
        // Predicated region
        $region65: #{bc_mlp_forward.1} parent=63 // pred_check
          %p578 = pneg %p198
        $region66: #{bc_mlp_forward.1} parent=63 // pred_check_branch
          %580 = sbr.rel (%p578) target = $region68
        $region67: #{bc_mlp_forward.1} parent=63 // pred_region
          %p581 = scmp.lt.s32.totalorder %s23, 1
          %s582 = scalar_select %p581, %s23, 1
          %s583 = smul.addr %s582, 8
          %s584 = scalar_lea.vmem %s7, %s583
        $region68: #{bc_mlp_forward.1} parent=63 // pred_fallthru
          _
      $region64: #{bc_mlp_forward.1} parent=5 // pred_fallthru
        _
    $region6: #{bc_mlp_forward.1} parent=1 // loop_footer
      %s21 = sadd.s32 1, %s17
    $region7: #{bc_mlp_forward.1} parent=1 // loop_footer_branch
      %16 = sbr.rel target = $region3
    $region8: #{bc_mlp_forward.1} parent=1 // loop_exit
      _
    %585 = vsyncpa [#allocation3], 1
    %s586 = scalar_lea.sflag [#allocation3], 1
    %587 = vsyncpa %s586, 1
    %588 = vsyncpa [#allocation5], 1

</llo_original>
